<compile_context>
chip_gen: v5e
topology: v5e:2x2
jax: 0.10.0
libtpu: 0.0.40
codegen_flags: <defaults>
</compile_context>

<pallas_src>
import jax
import jax.numpy as jnp
from jax import lax
from jax.experimental import pallas as pl
from jax.experimental.pallas import tpu as pltpu

F32 = jnp.float32
BN_EPS = 1e-5
VMEM_LIMIT_BYTES = 32 * 1024 * 1024  # safe scoped limit on v5e/v6e/v7x


def _cparams(dimension_semantics):
    return pltpu.CompilerParams(dimension_semantics=dimension_semantics,
                                vmem_limit_bytes=VMEM_LIMIT_BYTES)


# ----------------------------- in-kernel helpers -----------------------------

def _partial_stats(v):
    """Per-image BN partial statistics.  v: (H, W, C) f32 -> ((1,C) sum, (1,C) sumsq)."""
    s1 = jnp.sum(jnp.sum(v, axis=0), axis=0, keepdims=True)
    s2 = jnp.sum(jnp.sum(v * v, axis=0), axis=0, keepdims=True)
    return s1, s2


def _store_stats(stats_ref, s1, s2):
    c = s1.shape[-1]
    stats_ref[:, 0:1, :] = s1.reshape(1, 1, c)
    stats_ref[:, 1:2, :] = s2.reshape(1, 1, c)


def _combine_1x1(dep_vals, w_ref):
    """sum_j x_j @ W_j  (== concat(deps, channel) followed by a 1x1 conv).

    dep_vals: list of (H, W, Cin) f32 values; w_ref: (ndeps, Cin, Cout) ref.
    Uses H-batched MXU matmuls; no channel concat is ever materialized.
    """
    cout = w_ref.shape[-1]
    acc = None
    for j, x in enumerate(dep_vals):
        h, _, cin = x.shape
        wj = jnp.broadcast_to(w_ref[j], (h, cin, cout))
        t = jnp.einsum('hwc,hcd->hwd', x, wj, preferred_element_type=F32)
        acc = t if acc is None else acc + t
    return acc


def _scale_shift(stats_ref, gamma_ref, beta_ref, inv_count):
    """Fold summed partial stats into a per-channel affine (training-mode BN)."""
    s = jnp.sum(stats_ref[...], axis=0)          # (2, C): sum over batch partials
    mean = s[0:1, :] * inv_count                 # (1, C)
    var = s[1:2, :] * inv_count - mean * mean    # biased variance
    scale = gamma_ref[...] * lax.rsqrt(var + BN_EPS)
    shift = beta_ref[...] - mean * scale
    return scale, shift


# ------------------------------- Pallas kernels -------------------------------

def node_conv3x3(deps, proc_w, conv_w):
    """Fused [optional multi-input 1x1 processor] + 3x3 same conv + BN partial stats.

    deps:   list of (N, H, W, C) activations (all with C channels).
    proc_w: (ndeps, C, C) or None.   conv_w: (9, C, C) with tap order kh*3+kw.
    Returns (y, stats): y (N, H, W, C) pre-BN conv output, stats (N, 2, C).
    """
    n, h, w, c = deps[0].shape
    n_deps = len(deps)
    has_proc = proc_w is not None

    def kernel(*refs):
        dep_refs = refs[:n_deps]
        pos = n_deps
        proc_ref = None
        if has_proc:
            proc_ref = refs[pos]
            pos += 1
        wconv_ref = refs[pos]
        y_ref = refs[pos + 1]
        stats_ref = refs[pos + 2]
        hpad_ref = refs[pos + 3]

        dep_vals = [r[0] for r in dep_refs]                     # (H, W, C) each
        hin = _combine_1x1(dep_vals, proc_ref) if has_proc else dep_vals[0]

        # Zero-pad combined input into the VMEM halo scratch (border of 1).
        hpad_ref[...] = jnp.zeros_like(hpad_ref)
        hpad_ref[1:h + 1, 1:w + 1, :] = hin

        # 3x3 conv as 9 accumulating shifted-window matmuls — no im2col in HBM.
        acc = jnp.zeros((h, w, c), F32)
        for kh in range(3):
            for kw in range(3):
                win = hpad_ref[kh:kh + h, kw:kw + w, :]
                wk = jnp.broadcast_to(wconv_ref[kh * 3 + kw], (h, c, c))
                acc = acc + jnp.einsum('hwc,hcd->hwd', win, wk,
                                       preferred_element_type=F32)

        y_ref[0] = acc
        s1, s2 = _partial_stats(acc)
        _store_stats(stats_ref, s1, s2)

    in_specs = [pl.BlockSpec((1, h, w, c), lambda i: (i, 0, 0, 0)) for _ in deps]
    inputs = list(deps)
    if has_proc:
        in_specs.append(pl.BlockSpec(proc_w.shape, lambda i: (0, 0, 0)))
        inputs.append(proc_w)
    in_specs.append(pl.BlockSpec(conv_w.shape, lambda i: (0, 0, 0)))
    inputs.append(conv_w)

    return pl.pallas_call(
        kernel,
        grid=(n,),
        in_specs=in_specs,
        out_specs=(pl.BlockSpec((1, h, w, c), lambda i: (i, 0, 0, 0)),
                   pl.BlockSpec((1, 2, c), lambda i: (i, 0, 0))),
        out_shape=(jax.ShapeDtypeStruct((n, h, w, c), F32),
                   jax.ShapeDtypeStruct((n, 2, c), F32)),
        scratch_shapes=[pltpu.VMEM((h + 2, w + 2, c), F32)],
        compiler_params=_cparams(("parallel",)),
    )(*inputs)


def conv1x1_combine(deps, w, with_stats):
    """Fused multi-input 1x1 conv (replaces concat + 1x1); optional BN partial stats."""
    n, h, wd, cin = deps[0].shape
    cout = w.shape[-1]
    n_deps = len(deps)

    def kernel(*refs):
        dep_refs = refs[:n_deps]
        w_ref = refs[n_deps]
        y_ref = refs[n_deps + 1]
        out = _combine_1x1([r[0] for r in dep_refs], w_ref)
        y_ref[0] = out
        if with_stats:
            stats_ref = refs[n_deps + 2]
            s1, s2 = _partial_stats(out)
            _store_stats(stats_ref, s1, s2)

    in_specs = [pl.BlockSpec((1, h, wd, cin), lambda i: (i, 0, 0, 0)) for _ in deps]
    in_specs.append(pl.BlockSpec(w.shape, lambda i: (0, 0, 0)))

    out_specs = [pl.BlockSpec((1, h, wd, cout), lambda i: (i, 0, 0, 0))]
    out_shape = [jax.ShapeDtypeStruct((n, h, wd, cout), F32)]
    if with_stats:
        out_specs.append(pl.BlockSpec((1, 2, cout), lambda i: (i, 0, 0)))
        out_shape.append(jax.ShapeDtypeStruct((n, 2, cout), F32))

    return pl.pallas_call(
        kernel,
        grid=(n,),
        in_specs=in_specs,
        out_specs=tuple(out_specs) if with_stats else out_specs[0],
        out_shape=tuple(out_shape) if with_stats else out_shape[0],
        compiler_params=_cparams(("parallel",)),
    )(*deps, w)


def batch_stats(x):
    """BN partial statistics of an existing activation (no copy of x)."""
    n, h, w, c = x.shape

    def kernel(x_ref, stats_ref):
        s1, s2 = _partial_stats(x_ref[0])
        _store_stats(stats_ref, s1, s2)

    return pl.pallas_call(
        kernel,
        grid=(n,),
        in_specs=[pl.BlockSpec((1, h, w, c), lambda i: (i, 0, 0, 0))],
        out_specs=pl.BlockSpec((1, 2, c), lambda i: (i, 0, 0)),
        out_shape=jax.ShapeDtypeStruct((n, 2, c), F32),
        compiler_params=_cparams(("parallel",)),
    )(x)


def bn_relu(y, stats, gamma, beta):
    """BatchNorm (training-mode batch stats, from precomputed partials) + ReLU."""
    n, h, w, c = y.shape
    inv_count = 1.0 / float(n * h * w)

    def kernel(y_ref, stats_ref, gamma_ref, beta_ref, o_ref):
        scale, shift = _scale_shift(stats_ref, gamma_ref, beta_ref, inv_count)
        z = y_ref[...] * scale.reshape(1, 1, 1, c) + shift.reshape(1, 1, 1, c)
        o_ref[...] = jnp.maximum(z, 0.0)

    return pl.pallas_call(
        kernel,
        grid=(n,),
        in_specs=[pl.BlockSpec((1, h, w, c), lambda i: (i, 0, 0, 0)),
                  pl.BlockSpec((n, 2, c), lambda i: (0, 0, 0)),
                  pl.BlockSpec((1, c), lambda i: (0, 0)),
                  pl.BlockSpec((1, c), lambda i: (0, 0))],
        out_specs=pl.BlockSpec((1, h, w, c), lambda i: (i, 0, 0, 0)),
        out_shape=jax.ShapeDtypeStruct((n, h, w, c), F32),
        compiler_params=_cparams(("parallel",)),
    )(y, stats, gamma.reshape(1, c), beta.reshape(1, c))


def bn_relu_maxpool(y, stats, gamma, beta):
    """BatchNorm + ReLU + fused 2x2/stride-2 max pool (no strided HBM slices)."""
    n, h, w, c = y.shape
    assert h % 2 == 0 and w % 2 == 0, "MaxPool2d(2,2) fusion expects even H, W"
    h2, w2 = h // 2, w // 2
    inv_count = 1.0 / float(n * h * w)

    # Free row-major reinterpretation: (N,H,W,C) -> (N*H2, 2, W2, 2, C).
    y5 = y.reshape(n * h2, 2, w2, 2, c)

    def kernel(y_ref, stats_ref, gamma_ref, beta_ref, o_ref):
        scale, shift = _scale_shift(stats_ref, gamma_ref, beta_ref, inv_count)
        z = y_ref[...] * scale.reshape(1, 1, 1, 1, c) + shift.reshape(1, 1, 1, 1, c)
        z = jnp.maximum(z, 0.0)          # (1, 2, W2, 2, C)
        z = jnp.max(z, axis=3)           # pool over W pairs -> (1, 2, W2, C)
        o_ref[...] = jnp.max(z, axis=1)  # pool over H pairs -> (1, W2, C)

    out = pl.pallas_call(
        kernel,
        grid=(n * h2,),
        in_specs=[pl.BlockSpec((1, 2, w2, 2, c), lambda i: (i, 0, 0, 0, 0)),
                  pl.BlockSpec((n, 2, c), lambda i: (0, 0, 0)),
                  pl.BlockSpec((1, c), lambda i: (0, 0)),
                  pl.BlockSpec((1, c), lambda i: (0, 0))],
        out_specs=pl.BlockSpec((1, w2, c), lambda i: (i, 0, 0)),
        out_shape=jax.ShapeDtypeStruct((n * h2, w2, c), F32),
        compiler_params=_cparams(("parallel",)),
    )(y5, stats, gamma.reshape(1, c), beta.reshape(1, c))
    return out.reshape(n, h2, w2, c)


def gap_linear(x, w, b):
    """Global average pool + flatten + Linear, fused (tiny epilogue, single block)."""
    n, h, wd, c = x.shape
    f = w.shape[1]
    x3 = x.reshape(n, h * wd, c)

    def kernel(x_ref, w_ref, b_ref, o_ref):
        pooled = jnp.mean(x_ref[...], axis=1)                   # (N, C)
        o_ref[...] = jnp.dot(pooled, w_ref[...],
                             preferred_element_type=F32) + b_ref[...]

    return pl.pallas_call(
        kernel,
        grid=(1,),
        in_specs=[pl.BlockSpec((n, h * wd, c), lambda i: (0, 0, 0)),
                  pl.BlockSpec((c, f), lambda i: (0, 0)),
                  pl.BlockSpec((1, f), lambda i: (0, 0))],
        out_specs=pl.BlockSpec((n, f), lambda i: (0, 0)),
        out_shape=jax.ShapeDtypeStruct((n, f), F32),
        compiler_params=_cparams(("arbitrary",)),
    )(x3, w, b.reshape(1, f))


# --------------------------- genome decoding logic ---------------------------

def phase_active(gene):
    return sum(sum(t) for t in gene[:-1]) != 0


def build_dependency_graph(gene):
    graph = {}
    residual = gene[-1][0] == 1
    graph[1] = []
    for i in range(len(gene) - 1):
        graph[i + 2] = [j + 1 for j in range(len(gene[i])) if gene[i][j] == 1]
    graph[len(gene) + 1] = [0] if residual else []

    no_inputs, no_outputs = [], []
    for i in range(1, len(gene) + 1):
        if len(graph[i]) == 0:
            no_inputs.append(i)
        has_output = False
        for j in range(i + 1, len(gene) + 2):
            if i in graph[j]:
                has_output = True
                break
        if not has_output:
            no_outputs.append(i)

    for node in no_outputs:
        if node not in no_inputs:
            graph[len(gene) + 1].append(node)
    for node in no_inputs:
        if node not in no_outputs:
            graph[node].append(0)
    return graph


# ------------------------------ initialization ------------------------------

def _kaiming(key, shape, fan_in):
    return jax.random.normal(key, shape, dtype=F32) * jnp.sqrt(2.0 / fan_in)


def init_evonetwork(key, genome, channels, out_features):
    genome = [g for g in genome if phase_active(g)]
    channels = channels[:len(genome)]
    phases = []
    for gene, (cin, cout) in zip(genome, channels):
        graph = build_dependency_graph(gene)
        n_nodes = len(gene)
        key, kf = jax.random.split(key)
        phase = {
            'graph': graph,
            'n_nodes': n_nodes,
            'channel_flag': cin != cout,
            'first_conv': _kaiming(kf, (1, cin, cout), cin),        # (ndeps=1, Cin, Cout)
            'out_gamma': jnp.ones((cout,), F32),
            'out_beta': jnp.zeros((cout,), F32),
        }
        nodes = []
        for i in range(n_nodes):
            key, kn = jax.random.split(key)
            if len(graph[i + 1]) > 0:
                nodes.append({'w': _kaiming(kn, (9, cout, cout), 9 * cout),  # kh*3+kw taps
                              'gamma': jnp.ones((cout,), F32),
                              'beta': jnp.zeros((cout,), F32)})
            else:
                nodes.append(None)
        phase['nodes'] = nodes
        procs = {}
        for node_idx, deps in graph.items():
            if len(deps) > 1:
                key, kp = jax.random.split(key)
                procs[node_idx] = _kaiming(kp, (len(deps), cout, cout), len(deps) * cout)
        phase['processors'] = procs
        phases.append(phase)

    c_final = channels[-1][1]
    key, kw, kb = jax.random.split(key, 3)
    bound = float(c_final) ** -0.5
    return {
        'phases': phases,
        'linear_w': jax.random.uniform(kw, (c_final, out_features),
                                       minval=-bound, maxval=bound, dtype=F32),
        'linear_b': jax.random.uniform(kb, (out_features,),
                                       minval=-bound, maxval=bound, dtype=F32),
    }


# --------------------------------- forward ----------------------------------

def phase_forward(x, phase, pool):
    graph = phase['graph']
    n_nodes = phase['n_nodes']

    if phase['channel_flag']:
        x = conv1x1_combine([x], phase['first_conv'], with_stats=False)
    outputs = [x]

    for i in range(1, n_nodes + 1):
        deps = graph[i]
        if not deps:
            outputs.append(None)
            continue
        node = phase['nodes'][i - 1]
        dep_ts = [outputs[d] for d in deps]
        proc_w = phase['processors'].get(i)          # present iff len(deps) > 1
        y, stats = node_conv3x3(dep_ts, proc_w, node['w'])
        outputs.append(bn_relu(y, stats, node['gamma'], node['beta']))

    out_deps = graph[n_nodes + 1]
    dep_ts = [outputs[d] for d in out_deps]
    proc_w = phase['processors'].get(n_nodes + 1)
    if proc_w is not None:
        y, stats = conv1x1_combine(dep_ts, proc_w, with_stats=True)
    else:
        assert len(dep_ts) == 1
        y = dep_ts[0]
        stats = batch_stats(y)

    finalize = bn_relu_maxpool if pool else bn_relu
    return finalize(y, stats, phase['out_gamma'], phase['out_beta'])


def evonetwork_forward(params, x_nchw):
    # NCHW (PyTorch) -> NHWC (kernel layout)
    x = jnp.transpose(x_nchw, (0, 2, 3, 1)).astype(F32)
    phases = params['phases']
    for i, ph in enumerate(phases):
        x = phase_forward(x, ph, pool=(i != len(phases) - 1))  # MaxPool2d(2,2) between phases
    return gap_linear(x, params['linear_w'], params['linear_b'])


# ----------------------------------- main ------------------------------------

if __name__ == "__main__":
    # Two active residual phases; gene format: k-1 adjacency lists + residual bit.
    genome = [
        [[1], [0, 1], [1]],   # phase 1: 1->2, 2->3, residual skip
        [[1], [1, 1], [0]],   # phase 2: 1->2, {1,2}->3, no residual
    ]
    channels = [(4, 8), (8, 16)]
    out_features = 10
    data_shape = (16, 16)

    key = jax.random.PRNGKey(0)
    pkey, xkey = jax.random.split(key)
    params = init_evonetwork(pkey, genome, channels, out_features)

    x = jax.random.normal(xkey, (2, channels[0][0], *data_shape), dtype=jnp.float32)

    out = evonetwork_forward(params, x)
    out = jax.block_until_ready(out)
    assert out.shape == (2, out_features), out.shape
    assert bool(jnp.all(jnp.isfinite(out)))
    print("KERNEL_OK")
</pallas_src>

<mosaic_0001>
module attributes {stable_mosaic.version = 11 : i64} {
  func.func @kernel(%arg0: i32, %arg1: memref<1x16x16x4xf32, #tpu.memory_space<vmem>>, %arg2: memref<1x4x8xf32, #tpu.memory_space<vmem>>, %arg3: memref<1x16x16x8xf32, #tpu.memory_space<vmem>>) attributes {dimension_semantics = [#tpu.dimension_semantics<parallel>], iteration_bounds = array<i64: 2>, scalar_prefetch = 0 : i64, scratch_operands = 0 : i64, tpu.core_type = #tpu.core_type<tc>, window_params = [{transform_indices = @transform_0, window_bounds = array<i64: 1, 16, 16, 4>}, {pipeline_mode = #tpu.pipeline_mode<synchronous>, transform_indices = @transform_1, window_bounds = array<i64: 1, 4, 8>}, {transform_indices = @transform_2, window_bounds = array<i64: 1, 16, 16, 8>}]} {
    %c0 = arith.constant 0 : index
    %c0_0 = arith.constant 0 : index
    %c0_1 = arith.constant 0 : index
    %c0_2 = arith.constant 0 : index
    %0 = vector.load %arg1[%c0, %c0_0, %c0_1, %c0_2] : memref<1x16x16x4xf32, #tpu.memory_space<vmem>>, vector<1x16x16x4xf32>
    %1 = vector.shape_cast %0 : vector<1x16x16x4xf32> to vector<16x16x4xf32>
    %c0_3 = arith.constant 0 : index
    %c0_4 = arith.constant 0 : index
    %c0_5 = arith.constant 0 : index
    %2 = vector.load %arg2[%c0_3, %c0_4, %c0_5] : memref<1x4x8xf32, #tpu.memory_space<vmem>>, vector<1x4x8xf32>
    %3 = vector.shape_cast %2 : vector<1x4x8xf32> to vector<4x8xf32>
    %4 = vector.shape_cast %3 : vector<4x8xf32> to vector<1x4x8xf32>
    %5 = vector.broadcast %4 : vector<1x4x8xf32> to vector<16x4x8xf32>
    "tpu.trace_start"() <{level = 10 : i32, message = "hwc,hcd->hwd"}> : () -> ()
    %cst = arith.constant dense<0.000000e+00> : vector<16x16x8xf32>
    %6 = tpu.matmul %1, %5, %cst {dimension_numbers = #tpu.dot_dimension_numbers<[2], [1], [1], [2], [0, 0, 0, 1, 1, 2], [0], [0]>} : vector<16x16x4xf32>, vector<16x4x8xf32>, vector<16x16x8xf32> -> vector<16x16x8xf32>
    "tpu.trace_stop"() : () -> ()
    %c0_6 = arith.constant 0 : index
    %c0_7 = arith.constant 0 : index
    %c0_8 = arith.constant 0 : index
    %c0_9 = arith.constant 0 : index
    %7 = vector.load %arg3[%c0_6, %c0_7, %c0_8, %c0_9] : memref<1x16x16x8xf32, #tpu.memory_space<vmem>>, vector<1x16x16x8xf32>
    %8 = vector.shape_cast %7 : vector<1x16x16x8xf32> to vector<16x16x8xf32>
    %9 = vector.shape_cast %6 : vector<16x16x8xf32> to vector<1x16x16x8xf32>
    tpu.vector_store %arg3[%c0_6, %c0_7, %c0_8, %c0_9], %9 {strides = array<i32>} : memref<1x16x16x8xf32, #tpu.memory_space<vmem>>, vector<1x16x16x8xf32>,
    return
  }
  func.func @transform_0(%arg0: i32) -> (i32, i32, i32, i32) {
    %c0_i32 = arith.constant 0 : i32
    %c0_i32_0 = arith.constant 0 : i32
    %c0_i32_1 = arith.constant 0 : i32
    %c0_i32_2 = arith.constant 0 : i32
    return %arg0, %c0_i32, %c0_i32_0, %c0_i32_1 : i32, i32, i32, i32
  }
  func.func @transform_1(%arg0: i32) -> (i32, i32, i32) {
    %c0_i32 = arith.constant 0 : i32
    %c0_i32_0 = arith.constant 0 : i32
    %c0_i32_1 = arith.constant 0 : i32
    %c0_i32_2 = arith.constant 0 : i32
    return %c0_i32, %c0_i32_0, %c0_i32_1 : i32, i32, i32
  }
  func.func @transform_2(%arg0: i32) -> (i32, i32, i32, i32) {
    %c0_i32 = arith.constant 0 : i32
    %c0_i32_0 = arith.constant 0 : i32
    %c0_i32_1 = arith.constant 0 : i32
    %c0_i32_2 = arith.constant 0 : i32
    return %arg0, %c0_i32, %c0_i32_0, %c0_i32_1 : i32, i32, i32, i32
  }
}

</mosaic_0001>

<llo_original>
// kernel: tpu_custom_call.1
$region0: #{tpu_custom_call.1}
  #allocation0 [shape = 'u32[]', space=smem, size = 0x4, offset = 0x4, fixed_abs, tag = 'smem constant byte address 0x4 - core index']
  #allocation1 [shape = 'u32[72,128]{1,0:T(1,128)}', space=vmem, size = 0x9000, scoped, tag = 'internal scratch']
  %s0 = inlined_call_operand.vmem [shape: f32[2,16,16,4], index: 0, kind: input, shape index: {}]
  %s1 = inlined_call_operand.vmem [shape: f32[1,4,8], index: 1, kind: input, shape index: {}]
  %s2 = inlined_call_operand.vmem [shape: f32[2,16,16,8], index: 2, kind: output, shape index: {}]
  %s3 = sld [smem:[#allocation0]]
  $region41: #{tpu_custom_call.1} parent=0
    _
  %s5 = ssub.s32 1, %s3
  %s6 = scalar_select 0, %s5, %s3
  loop: start=0, step=1, limit=4
  $region2: #{tpu_custom_call.1} parent=0 // loop_pre_header
    _
  $region3: #{tpu_custom_call.1} parent=0 // loop_header
    %s8 = sphi 0, %s12
    %p9 = scmp.ge.s32.totalorder %s8, 4
    %s18 = sphi 0, %s20
    %s21 = sphi 0, %s18
    %s22 = sphi 0, %s21
    %s38 = sphi 0, %s22
    %s42 = sphi 0, %s42
    %s44 = sphi 0, %s42
    %s45 = sphi 0, %s44
    %s59 = sphi 0, %s45
    %s65 = sphi 0, %s67
    %s68 = sphi 0, %s65
    %s69 = sphi 0, %s68
    %s85 = sphi 0, %s69
  $region4: #{tpu_custom_call.1} parent=0 // loop_header_branch
    %11 = sbr.rel (%p9) target = $region8
  $region5: #{tpu_custom_call.1} parent=0 // loop_body
    %s13 = ssub.s32 %s8, 1
    %s14 = ssub.s32 %s8, 2
    %s15 = sadd.s32 %s8, 1
    %s16 = ssub.s32 %s8, %s15
    %p17 = scmp.eq.s32.totalorder %s16, 0
    %s19 = sadd.s32 %s18, 1
    %s20 = scalar_select %p17, %s18, %s19
    %p23 = pneg %p17
    %p24 = scmp.eq.s32.totalorder %s8, 1
    %p25 = por %p23, %p24
    %p26 = scmp.ne.s32.totalorder %s18, %s21
    %p27 = scmp.eq.s32.totalorder %s8, 0
    %p28 = por %p26, %p27
    %p29 = scmp.ne.s32.totalorder %s18, %s21
    %p30 = scmp.eq.s32.totalorder %s13, 1
    %p31 = por %p29, %p30
    %p32 = scmp.ne.s32.totalorder %s21, %s22
    %p33 = scmp.eq.s32.totalorder %s13, 0
    %p34 = por %p32, %p33
    %p35 = scmp.ne.s32.totalorder %s21, %s22
    %p36 = scmp.eq.s32.totalorder %s14, 1
    %p37 = por %p35, %p36
    %p39 = scmp.ne.s32.totalorder %s22, %s38
    %p40 = scmp.eq.s32.totalorder %s14, 0
    %p41 = por %p39, %p40
    %s43 = sadd.s32 %s42, 1
    %p46 = scmp.eq.s32.totalorder %s8, 1
    %p47 = scmp.ne.s32.totalorder %s42, %s44
    %p48 = scmp.eq.s32.totalorder %s8, 0
    %p49 = por %p47, %p48
    %p50 = scmp.ne.s32.totalorder %s42, %s44
    %p51 = scmp.eq.s32.totalorder %s13, 1
    %p52 = por %p50, %p51
    %p53 = scmp.ne.s32.totalorder %s44, %s45
    %p54 = scmp.eq.s32.totalorder %s13, 0
    %p55 = por %p53, %p54
    %p56 = scmp.ne.s32.totalorder %s44, %s45
    %p57 = scmp.eq.s32.totalorder %s14, 1
    %p58 = por %p56, %p57
    %p60 = scmp.ne.s32.totalorder %s45, %s59
    %p61 = scmp.eq.s32.totalorder %s14, 0
    %p62 = por %p60, %p61
    %s63 = ssub.s32 %s8, %s15
    %p64 = scmp.eq.s32.totalorder %s63, 0
    %s66 = sadd.s32 %s65, 1
    %s67 = scalar_select %p64, %s65, %s66
    %p70 = pneg %p64
    %p71 = scmp.eq.s32.totalorder %s8, 1
    %p72 = por %p70, %p71
    %p73 = scmp.ne.s32.totalorder %s65, %s68
    %p74 = scmp.eq.s32.totalorder %s8, 0
    %p75 = por %p73, %p74
    %p76 = scmp.ne.s32.totalorder %s65, %s68
    %p77 = scmp.eq.s32.totalorder %s13, 1
    %p78 = por %p76, %p77
    %p79 = scmp.ne.s32.totalorder %s68, %s69
    %p80 = scmp.eq.s32.totalorder %s13, 0
    %p81 = por %p79, %p80
    %p82 = scmp.ne.s32.totalorder %s68, %s69
    %p83 = scmp.eq.s32.totalorder %s14, 1
    %p84 = por %p82, %p83
    %p86 = scmp.ne.s32.totalorder %s69, %s85
    %p87 = scmp.eq.s32.totalorder %s14, 0
    %p88 = por %p86, %p87
    %p89 = scmp.le.s32.totalorder 1, %s8
    %p90 = scmp.lt.s32.totalorder %s8, 3
    %p91 = pnand %p89, %p90
    %p92 = pneg %p91
    // Predicated region
    $region9: #{tpu_custom_call.1} parent=5 // pred_check
      _
    $region10: #{tpu_custom_call.1} parent=5 // pred_check_branch
      %94 = sbr.rel (%p91) target = $region12
    $region11: #{tpu_custom_call.1} parent=5 // pred_region
      %s95 = ssub.s32 %s8, 1
      // Predicated region
      $region13: #{tpu_custom_call.1} parent=11 // pred_check
        %p96 = pneg %p55
      $region14: #{tpu_custom_call.1} parent=11 // pred_check_branch
        %98 = sbr.rel (%p96) target = $region16
      $region15: #{tpu_custom_call.1} parent=11 // pred_region
        _
      $region16: #{tpu_custom_call.1} parent=11 // pred_fallthru
        _
    $region12: #{tpu_custom_call.1} parent=5 // pred_fallthru
      _
    %p99 = scmp.lt.s32.totalorder %s8, 2
    // Predicated region
    $region17: #{tpu_custom_call.1} parent=5 // pred_check
      %p100 = pneg %p99
    $region18: #{tpu_custom_call.1} parent=5 // pred_check_branch
      %102 = sbr.rel (%p100) target = $region20
    $region19: #{tpu_custom_call.1} parent=5 // pred_region
      // Predicated region
      $region21: #{tpu_custom_call.1} parent=19 // pred_check
        %p103 = pneg %p28
      $region22: #{tpu_custom_call.1} parent=19 // pred_check_branch
        %105 = sbr.rel (%p103) target = $region24
      $region23: #{tpu_custom_call.1} parent=19 // pred_region
        %p106 = scmp.lt.s32.totalorder %s8, 1
        %s107 = scalar_select %p106, %s8, 1
        %s108 = smul.addr %s107, 32
        %s109 = smul.addr %s108, 8
        %s110 = scalar_lea.vmem %s0, %s109
      $region24: #{tpu_custom_call.1} parent=19 // pred_fallthru
        _
    $region20: #{tpu_custom_call.1} parent=5 // pred_fallthru
      _
    %p111 = scmp.le.s32.totalorder 1, %s8
    %p112 = scmp.lt.s32.totalorder %s8, 3
    %p113 = pnand %p111, %p112
    %p114 = pneg %p113
    // Predicated region
    $region25: #{tpu_custom_call.1} parent=5 // pred_check
      _
    $region26: #{tpu_custom_call.1} parent=5 // pred_check_branch
      %116 = sbr.rel (%p113) target = $region28
    $region27: #{tpu_custom_call.1} parent=5 // pred_region
      %s117 = ssub.s32 %s8, 1
      %p118 = scmp.lt.s32.totalorder %s13, 1
      %s119 = scalar_select %p118, %s13, 1
      %s120 = smul.addr %s119, 32
      %s121 = smul.addr %s120, 8
      %s122 = scalar_lea.vmem %s0, %s121
      %p123 = pneg %p34
      %p124 = pneg %p31
      %p125 = pneg %p55
      %p126 = pneg %p52
      %p127 = pneg %p81
      %p128 = pneg %p78
      %p129 = scmp.lt.s32.totalorder %s13, 1
      %s130 = scalar_select %p129, %s13, 1
      %s131 = smul.addr %s130, 32
      %s132 = smul.addr %s131, 8
      %s133 = scalar_lea.vmem %s2, %s132
      %p134 = scmp.lt.s32.totalorder %s13, 1
      %s135 = scalar_select %p134, %s13, 1
      %s136 = smul.addr %s135, 32
      %s137 = smul.addr %s136, 8
      %s138 = scalar_lea.vmem %s0, %s137
      %p139 = scmp.lt.s32.totalorder %s13, 1
      %s140 = scalar_select %p139, %s13, 1
      %s141 = smul.addr %s140, 32
      %s142 = smul.addr %s141, 8
      %s143 = scalar_lea.vmem %s2, %s142
      %v144 = vld [vmem:[%s138] sm:$0xff]
      %v145 = vld [vmem:[%s138 + $0x8] sm:$0xff]
      %v146 = vld [vmem:[%s138 + $0x10] sm:$0xff]
      %v147 = vld [vmem:[%s138 + $0x18] sm:$0xff]
      %v148 = vld [vmem:[%s138 + $0x20] sm:$0xff]
      %v149 = vld [vmem:[%s138 + $0x28] sm:$0xff]
      %v150 = vld [vmem:[%s138 + $0x30] sm:$0xff]
      %v151 = vld [vmem:[%s138 + $0x38] sm:$0xff]
      %v152 = vld [vmem:[%s138 + $0x40] sm:$0xff]
      %v153 = vld [vmem:[%s138 + $0x48] sm:$0xff]
      %v154 = vld [vmem:[%s138 + $0x50] sm:$0xff]
      %v155 = vld [vmem:[%s138 + $0x58] sm:$0xff]
      %v156 = vld [vmem:[%s138 + $0x60] sm:$0xff]
      %v157 = vld [vmem:[%s138 + $0x68] sm:$0xff]
      %v158 = vld [vmem:[%s138 + $0x70] sm:$0xff]
      %v159 = vld [vmem:[%s138 + $0x78] sm:$0xff]
      %v160 = vld [vmem:[%s138 + $0x80] sm:$0xff]
      %v161 = vld [vmem:[%s138 + $0x88] sm:$0xff]
      %v162 = vld [vmem:[%s138 + $0x90] sm:$0xff]
      %v163 = vld [vmem:[%s138 + $0x98] sm:$0xff]
      %v164 = vld [vmem:[%s138 + $0xa0] sm:$0xff]
      %v165 = vld [vmem:[%s138 + $0xa8] sm:$0xff]
      %v166 = vld [vmem:[%s138 + $0xb0] sm:$0xff]
      %v167 = vld [vmem:[%s138 + $0xb8] sm:$0xff]
      %v168 = vld [vmem:[%s138 + $0xc0] sm:$0xff]
      %v169 = vld [vmem:[%s138 + $0xc8] sm:$0xff]
      %v170 = vld [vmem:[%s138 + $0xd0] sm:$0xff]
      %v171 = vld [vmem:[%s138 + $0xd8] sm:$0xff]
      %v172 = vld [vmem:[%s138 + $0xe0] sm:$0xff]
      %v173 = vld [vmem:[%s138 + $0xe8] sm:$0xff]
      %v174 = vld [vmem:[%s138 + $0xf0] sm:$0xff]
      %v175 = vld [vmem:[%s138 + $0xf8] sm:$0xff]
      %v176 = vld [vmem:[%s1] sm:$0xf]
      %vm177 = vcmask 31744
      %v179 = vsel %vm177, %v144, 0
      %v182 = vsel %vm177, %v145, 0
      %vm184 = vcmask 1043456
      %v186 = vsel %vm184, %v176, 0
      %188 = vmatpush.msra.mxu0 0.0
      %189 = vmatpush.msra.mxu0 0.0
      %190 = vmatpush.msra.mxu0 0.0
      %191 = vmatpush.msra.mxu0 0.0
      %192 = vmatpush.msra.mxu0 0.0
      %193 = vmatpush.msra.mxu0 0.0
      %194 = vmatpush.msra.mxu0 0.0
      %195 = vmatpush.msra.mxu0 0.0
      %196 = vmatpush.msra.mxu0 0.0
      %197 = vmatpush.msra.mxu0 0.0
      %198 = vmatpush.msra.mxu0 0.0
      %199 = vmatpush.msra.mxu0 0.0
      %200 = vmatpush.msra.mxu0 0.0
      %201 = vmatpush.msra.mxu0 0.0
      %202 = vmatpush.msra.mxu0 0.0
      %203 = vmatpush.msra.mxu0 %v186
      %204 = vmatmul.f32.gmra.mxu0 %v179
      %v205 = vpop.f32.mrf.mxu0
      %v206 = vadd.f32 0.0, %v205
      %207 = vmatmul.f32.gmra.mxu0 %v182
      %v208 = vpop.f32.mrf.mxu0
      %v209 = vadd.f32 0.0, %v208
      %210 = vdwg.mxu0
      %v212 = vsel %vm177, %v146, 0
      %v215 = vsel %vm177, %v147, 0
      %217 = vmatpush.msra.mxu0 0.0
      %218 = vmatpush.msra.mxu0 0.0
      %219 = vmatpush.msra.mxu0 0.0
      %220 = vmatpush.msra.mxu0 0.0
      %221 = vmatpush.msra.mxu0 0.0
      %222 = vmatpush.msra.mxu0 0.0
      %223 = vmatpush.msra.mxu0 0.0
      %224 = vmatpush.msra.mxu0 0.0
      %225 = vmatpush.msra.mxu0 0.0
      %226 = vmatpush.msra.mxu0 0.0
      %227 = vmatpush.msra.mxu0 0.0
      %228 = vmatpush.msra.mxu0 0.0
      %229 = vmatpush.msra.mxu0 0.0
      %230 = vmatpush.msra.mxu0 0.0
      %231 = vmatpush.msra.mxu0 0.0
      %232 = vmatpush.msra.mxu0 %v186
      %233 = vmatmul.f32.gmra.mxu0 %v212
      %v234 = vpop.f32.mrf.mxu0
      %v235 = vadd.f32 0.0, %v234
      %236 = vmatmul.f32.gmra.mxu0 %v215
      %v237 = vpop.f32.mrf.mxu0
      %v238 = vadd.f32 0.0, %v237
      %239 = vdwg.mxu0
      %v241 = vsel %vm177, %v148, 0
      %v244 = vsel %vm177, %v149, 0
      %246 = vmatpush.msra.mxu0 0.0
      %247 = vmatpush.msra.mxu0 0.0
      %248 = vmatpush.msra.mxu0 0.0
      %249 = vmatpush.msra.mxu0 0.0
      %250 = vmatpush.msra.mxu0 0.0
      %251 = vmatpush.msra.mxu0 0.0
      %252 = vmatpush.msra.mxu0 0.0
      %253 = vmatpush.msra.mxu0 0.0
      %254 = vmatpush.msra.mxu0 0.0
      %255 = vmatpush.msra.mxu0 0.0
      %256 = vmatpush.msra.mxu0 0.0
      %257 = vmatpush.msra.mxu0 0.0
      %258 = vmatpush.msra.mxu0 0.0
      %259 = vmatpush.msra.mxu0 0.0
      %260 = vmatpush.msra.mxu0 0.0
      %261 = vmatpush.msra.mxu0 %v186
      %262 = vmatmul.f32.gmra.mxu0 %v241
      %v263 = vpop.f32.mrf.mxu0
      %v264 = vadd.f32 0.0, %v263
      %265 = vmatmul.f32.gmra.mxu0 %v244
      %v266 = vpop.f32.mrf.mxu0
      %v267 = vadd.f32 0.0, %v266
      %268 = vdwg.mxu0
      %v270 = vsel %vm177, %v150, 0
      %v273 = vsel %vm177, %v151, 0
      %275 = vmatpush.msra.mxu0 0.0
      %276 = vmatpush.msra.mxu0 0.0
      %277 = vmatpush.msra.mxu0 0.0
      %278 = vmatpush.msra.mxu0 0.0
      %279 = vmatpush.msra.mxu0 0.0
      %280 = vmatpush.msra.mxu0 0.0
      %281 = vmatpush.msra.mxu0 0.0
      %282 = vmatpush.msra.mxu0 0.0
      %283 = vmatpush.msra.mxu0 0.0
      %284 = vmatpush.msra.mxu0 0.0
      %285 = vmatpush.msra.mxu0 0.0
      %286 = vmatpush.msra.mxu0 0.0
      %287 = vmatpush.msra.mxu0 0.0
      %288 = vmatpush.msra.mxu0 0.0
      %289 = vmatpush.msra.mxu0 0.0
      %290 = vmatpush.msra.mxu0 %v186
      %291 = vmatmul.f32.gmra.mxu0 %v270
      %v292 = vpop.f32.mrf.mxu0
      %v293 = vadd.f32 0.0, %v292
      %294 = vmatmul.f32.gmra.mxu0 %v273
      %v295 = vpop.f32.mrf.mxu0
      %v296 = vadd.f32 0.0, %v295
      %297 = vdwg.mxu0
      %v299 = vsel %vm177, %v152, 0
      %v302 = vsel %vm177, %v153, 0
      %304 = vmatpush.msra.mxu0 0.0
      %305 = vmatpush.msra.mxu0 0.0
      %306 = vmatpush.msra.mxu0 0.0
      %307 = vmatpush.msra.mxu0 0.0
      %308 = vmatpush.msra.mxu0 0.0
      %309 = vmatpush.msra.mxu0 0.0
      %310 = vmatpush.msra.mxu0 0.0
      %311 = vmatpush.msra.mxu0 0.0
      %312 = vmatpush.msra.mxu0 0.0
      %313 = vmatpush.msra.mxu0 0.0
      %314 = vmatpush.msra.mxu0 0.0
      %315 = vmatpush.msra.mxu0 0.0
      %316 = vmatpush.msra.mxu0 0.0
      %317 = vmatpush.msra.mxu0 0.0
      %318 = vmatpush.msra.mxu0 0.0
      %319 = vmatpush.msra.mxu0 %v186
      %320 = vmatmul.f32.gmra.mxu0 %v299
      %v321 = vpop.f32.mrf.mxu0
      %v322 = vadd.f32 0.0, %v321
      %323 = vmatmul.f32.gmra.mxu0 %v302
      %v324 = vpop.f32.mrf.mxu0
      %v325 = vadd.f32 0.0, %v324
      %326 = vdwg.mxu0
      %v328 = vsel %vm177, %v154, 0
      %v331 = vsel %vm177, %v155, 0
      %333 = vmatpush.msra.mxu0 0.0
      %334 = vmatpush.msra.mxu0 0.0
      %335 = vmatpush.msra.mxu0 0.0
      %336 = vmatpush.msra.mxu0 0.0
      %337 = vmatpush.msra.mxu0 0.0
      %338 = vmatpush.msra.mxu0 0.0
      %339 = vmatpush.msra.mxu0 0.0
      %340 = vmatpush.msra.mxu0 0.0
      %341 = vmatpush.msra.mxu0 0.0
      %342 = vmatpush.msra.mxu0 0.0
      %343 = vmatpush.msra.mxu0 0.0
      %344 = vmatpush.msra.mxu0 0.0
      %345 = vmatpush.msra.mxu0 0.0
      %346 = vmatpush.msra.mxu0 0.0
      %347 = vmatpush.msra.mxu0 0.0
      %348 = vmatpush.msra.mxu0 %v186
      %349 = vmatmul.f32.gmra.mxu0 %v328
      %v350 = vpop.f32.mrf.mxu0
      %v351 = vadd.f32 0.0, %v350
      %352 = vmatmul.f32.gmra.mxu0 %v331
      %v353 = vpop.f32.mrf.mxu0
      %v354 = vadd.f32 0.0, %v353
      %355 = vdwg.mxu0
      %v357 = vsel %vm177, %v156, 0
      %v360 = vsel %vm177, %v157, 0
      %362 = vmatpush.msra.mxu0 0.0
      %363 = vmatpush.msra.mxu0 0.0
      %364 = vmatpush.msra.mxu0 0.0
      %365 = vmatpush.msra.mxu0 0.0
      %366 = vmatpush.msra.mxu0 0.0
      %367 = vmatpush.msra.mxu0 0.0
      %368 = vmatpush.msra.mxu0 0.0
      %369 = vmatpush.msra.mxu0 0.0
      %370 = vmatpush.msra.mxu0 0.0
      %371 = vmatpush.msra.mxu0 0.0
      %372 = vmatpush.msra.mxu0 0.0
      %373 = vmatpush.msra.mxu0 0.0
      %374 = vmatpush.msra.mxu0 0.0
      %375 = vmatpush.msra.mxu0 0.0
      %376 = vmatpush.msra.mxu0 0.0
      %377 = vmatpush.msra.mxu0 %v186
      %378 = vmatmul.f32.gmra.mxu0 %v357
      %v379 = vpop.f32.mrf.mxu0
      %v380 = vadd.f32 0.0, %v379
      %381 = vmatmul.f32.gmra.mxu0 %v360
      %v382 = vpop.f32.mrf.mxu0
      %v383 = vadd.f32 0.0, %v382
      %384 = vdwg.mxu0
      %v386 = vsel %vm177, %v158, 0
      %v389 = vsel %vm177, %v159, 0
      %391 = vmatpush.msra.mxu0 0.0
      %392 = vmatpush.msra.mxu0 0.0
      %393 = vmatpush.msra.mxu0 0.0
      %394 = vmatpush.msra.mxu0 0.0
      %395 = vmatpush.msra.mxu0 0.0
      %396 = vmatpush.msra.mxu0 0.0
      %397 = vmatpush.msra.mxu0 0.0
      %398 = vmatpush.msra.mxu0 0.0
      %399 = vmatpush.msra.mxu0 0.0
      %400 = vmatpush.msra.mxu0 0.0
      %401 = vmatpush.msra.mxu0 0.0
      %402 = vmatpush.msra.mxu0 0.0
      %403 = vmatpush.msra.mxu0 0.0
      %404 = vmatpush.msra.mxu0 0.0
      %405 = vmatpush.msra.mxu0 0.0
      %406 = vmatpush.msra.mxu0 %v186
      %407 = vmatmul.f32.gmra.mxu0 %v386
      %v408 = vpop.f32.mrf.mxu0
      %v409 = vadd.f32 0.0, %v408
      %410 = vmatmul.f32.gmra.mxu0 %v389
      %v411 = vpop.f32.mrf.mxu0
      %v412 = vadd.f32 0.0, %v411
      %413 = vdwg.mxu0
      %v415 = vsel %vm177, %v160, 0
      %v418 = vsel %vm177, %v161, 0
      %420 = vmatpush.msra.mxu0 0.0
      %421 = vmatpush.msra.mxu0 0.0
      %422 = vmatpush.msra.mxu0 0.0
      %423 = vmatpush.msra.mxu0 0.0
      %424 = vmatpush.msra.mxu0 0.0
      %425 = vmatpush.msra.mxu0 0.0
      %426 = vmatpush.msra.mxu0 0.0
      %427 = vmatpush.msra.mxu0 0.0
      %428 = vmatpush.msra.mxu0 0.0
      %429 = vmatpush.msra.mxu0 0.0
      %430 = vmatpush.msra.mxu0 0.0
      %431 = vmatpush.msra.mxu0 0.0
      %432 = vmatpush.msra.mxu0 0.0
      %433 = vmatpush.msra.mxu0 0.0
      %434 = vmatpush.msra.mxu0 0.0
      %435 = vmatpush.msra.mxu0 %v186
      %436 = vmatmul.f32.gmra.mxu0 %v415
      %v437 = vpop.f32.mrf.mxu0
      %v438 = vadd.f32 0.0, %v437
      %439 = vmatmul.f32.gmra.mxu0 %v418
      %v440 = vpop.f32.mrf.mxu0
      %v441 = vadd.f32 0.0, %v440
      %442 = vdwg.mxu0
      %v444 = vsel %vm177, %v162, 0
      %v447 = vsel %vm177, %v163, 0
      %449 = vmatpush.msra.mxu0 0.0
      %450 = vmatpush.msra.mxu0 0.0
      %451 = vmatpush.msra.mxu0 0.0
      %452 = vmatpush.msra.mxu0 0.0
      %453 = vmatpush.msra.mxu0 0.0
      %454 = vmatpush.msra.mxu0 0.0
      %455 = vmatpush.msra.mxu0 0.0
      %456 = vmatpush.msra.mxu0 0.0
      %457 = vmatpush.msra.mxu0 0.0
      %458 = vmatpush.msra.mxu0 0.0
      %459 = vmatpush.msra.mxu0 0.0
      %460 = vmatpush.msra.mxu0 0.0
      %461 = vmatpush.msra.mxu0 0.0
      %462 = vmatpush.msra.mxu0 0.0
      %463 = vmatpush.msra.mxu0 0.0
      %464 = vmatpush.msra.mxu0 %v186
      %465 = vmatmul.f32.gmra.mxu0 %v444
      %v466 = vpop.f32.mrf.mxu0
      %v467 = vadd.f32 0.0, %v466
      %468 = vmatmul.f32.gmra.mxu0 %v447
      %v469 = vpop.f32.mrf.mxu0
      %v470 = vadd.f32 0.0, %v469
      %471 = vdwg.mxu0
      %v473 = vsel %vm177, %v164, 0
      %v476 = vsel %vm177, %v165, 0
      %478 = vmatpush.msra.mxu0 0.0
      %479 = vmatpush.msra.mxu0 0.0
      %480 = vmatpush.msra.mxu0 0.0
      %481 = vmatpush.msra.mxu0 0.0
      %482 = vmatpush.msra.mxu0 0.0
      %483 = vmatpush.msra.mxu0 0.0
      %484 = vmatpush.msra.mxu0 0.0
      %485 = vmatpush.msra.mxu0 0.0
      %486 = vmatpush.msra.mxu0 0.0
      %487 = vmatpush.msra.mxu0 0.0
      %488 = vmatpush.msra.mxu0 0.0
      %489 = vmatpush.msra.mxu0 0.0
      %490 = vmatpush.msra.mxu0 0.0
      %491 = vmatpush.msra.mxu0 0.0
      %492 = vmatpush.msra.mxu0 0.0
      %493 = vmatpush.msra.mxu0 %v186
      %494 = vmatmul.f32.gmra.mxu0 %v473
      %v495 = vpop.f32.mrf.mxu0
      %v496 = vadd.f32 0.0, %v495
      %497 = vmatmul.f32.gmra.mxu0 %v476
      %v498 = vpop.f32.mrf.mxu0
      %v499 = vadd.f32 0.0, %v498
      %500 = vdwg.mxu0
      %v502 = vsel %vm177, %v166, 0
      %v505 = vsel %vm177, %v167, 0
      %507 = vmatpush.msra.mxu0 0.0
      %508 = vmatpush.msra.mxu0 0.0
      %509 = vmatpush.msra.mxu0 0.0
      %510 = vmatpush.msra.mxu0 0.0
      %511 = vmatpush.msra.mxu0 0.0
      %512 = vmatpush.msra.mxu0 0.0
      %513 = vmatpush.msra.mxu0 0.0
      %514 = vmatpush.msra.mxu0 0.0
      %515 = vmatpush.msra.mxu0 0.0
      %516 = vmatpush.msra.mxu0 0.0
      %517 = vmatpush.msra.mxu0 0.0
      %518 = vmatpush.msra.mxu0 0.0
      %519 = vmatpush.msra.mxu0 0.0
      %520 = vmatpush.msra.mxu0 0.0
      %521 = vmatpush.msra.mxu0 0.0
      %522 = vmatpush.msra.mxu0 %v186
      %523 = vmatmul.f32.gmra.mxu0 %v502
      %v524 = vpop.f32.mrf.mxu0
      %v525 = vadd.f32 0.0, %v524
      %526 = vmatmul.f32.gmra.mxu0 %v505
      %v527 = vpop.f32.mrf.mxu0
      %v528 = vadd.f32 0.0, %v527
      %529 = vdwg.mxu0
      %v531 = vsel %vm177, %v168, 0
      %v534 = vsel %vm177, %v169, 0
      %536 = vmatpush.msra.mxu0 0.0
      %537 = vmatpush.msra.mxu0 0.0
      %538 = vmatpush.msra.mxu0 0.0
      %539 = vmatpush.msra.mxu0 0.0
      %540 = vmatpush.msra.mxu0 0.0
      %541 = vmatpush.msra.mxu0 0.0
      %542 = vmatpush.msra.mxu0 0.0
      %543 = vmatpush.msra.mxu0 0.0
      %544 = vmatpush.msra.mxu0 0.0
      %545 = vmatpush.msra.mxu0 0.0
      %546 = vmatpush.msra.mxu0 0.0
      %547 = vmatpush.msra.mxu0 0.0
      %548 = vmatpush.msra.mxu0 0.0
      %549 = vmatpush.msra.mxu0 0.0
      %550 = vmatpush.msra.mxu0 0.0
      %551 = vmatpush.msra.mxu0 %v186
      %552 = vmatmul.f32.gmra.mxu0 %v531
      %v553 = vpop.f32.mrf.mxu0
      %v554 = vadd.f32 0.0, %v553
      %555 = vmatmul.f32.gmra.mxu0 %v534
      %v556 = vpop.f32.mrf.mxu0
      %v557 = vadd.f32 0.0, %v556
      %558 = vdwg.mxu0
      %v560 = vsel %vm177, %v170, 0
      %v563 = vsel %vm177, %v171, 0
      %565 = vmatpush.msra.mxu0 0.0
      %566 = vmatpush.msra.mxu0 0.0
      %567 = vmatpush.msra.mxu0 0.0
      %568 = vmatpush.msra.mxu0 0.0
      %569 = vmatpush.msra.mxu0 0.0
      %570 = vmatpush.msra.mxu0 0.0
      %571 = vmatpush.msra.mxu0 0.0
      %572 = vmatpush.msra.mxu0 0.0
      %573 = vmatpush.msra.mxu0 0.0
      %574 = vmatpush.msra.mxu0 0.0
      %575 = vmatpush.msra.mxu0 0.0
      %576 = vmatpush.msra.mxu0 0.0
      %577 = vmatpush.msra.mxu0 0.0
      %578 = vmatpush.msra.mxu0 0.0
      %579 = vmatpush.msra.mxu0 0.0
      %580 = vmatpush.msra.mxu0 %v186
      %581 = vmatmul.f32.gmra.mxu0 %v560
      %v582 = vpop.f32.mrf.mxu0
      %v583 = vadd.f32 0.0, %v582
      %584 = vmatmul.f32.gmra.mxu0 %v563
      %v585 = vpop.f32.mrf.mxu0
      %v586 = vadd.f32 0.0, %v585
      %587 = vdwg.mxu0
      %v589 = vsel %vm177, %v172, 0
      %v592 = vsel %vm177, %v173, 0
      %594 = vmatpush.msra.mxu0 0.0
      %595 = vmatpush.msra.mxu0 0.0
      %596 = vmatpush.msra.mxu0 0.0
      %597 = vmatpush.msra.mxu0 0.0
      %598 = vmatpush.msra.mxu0 0.0
      %599 = vmatpush.msra.mxu0 0.0
      %600 = vmatpush.msra.mxu0 0.0
      %601 = vmatpush.msra.mxu0 0.0
      %602 = vmatpush.msra.mxu0 0.0
      %603 = vmatpush.msra.mxu0 0.0
      %604 = vmatpush.msra.mxu0 0.0
      %605 = vmatpush.msra.mxu0 0.0
      %606 = vmatpush.msra.mxu0 0.0
      %607 = vmatpush.msra.mxu0 0.0
      %608 = vmatpush.msra.mxu0 0.0
      %609 = vmatpush.msra.mxu0 %v186
      %610 = vmatmul.f32.gmra.mxu0 %v589
      %v611 = vpop.f32.mrf.mxu0
      %v612 = vadd.f32 0.0, %v611
      %613 = vmatmul.f32.gmra.mxu0 %v592
      %v614 = vpop.f32.mrf.mxu0
      %v615 = vadd.f32 0.0, %v614
      %616 = vdwg.mxu0
      %v618 = vsel %vm177, %v174, 0
      %v621 = vsel %vm177, %v175, 0
      %623 = vmatpush.msra.mxu0 0.0
      %624 = vmatpush.msra.mxu0 0.0
      %625 = vmatpush.msra.mxu0 0.0
      %626 = vmatpush.msra.mxu0 0.0
      %627 = vmatpush.msra.mxu0 0.0
      %628 = vmatpush.msra.mxu0 0.0
      %629 = vmatpush.msra.mxu0 0.0
      %630 = vmatpush.msra.mxu0 0.0
      %631 = vmatpush.msra.mxu0 0.0
      %632 = vmatpush.msra.mxu0 0.0
      %633 = vmatpush.msra.mxu0 0.0
      %634 = vmatpush.msra.mxu0 0.0
      %635 = vmatpush.msra.mxu0 0.0
      %636 = vmatpush.msra.mxu0 0.0
      %637 = vmatpush.msra.mxu0 0.0
      %638 = vmatpush.msra.mxu0 %v186
      %639 = vmatmul.f32.gmra.mxu0 %v618
      %v640 = vpop.f32.mrf.mxu0
      %v641 = vadd.f32 0.0, %v640
      %642 = vmatmul.f32.gmra.mxu0 %v621
      %v643 = vpop.f32.mrf.mxu0
      %v644 = vadd.f32 0.0, %v643
      %645 = vdwg.mxu0
      %vm646 = vcmask 64512
      %647 = vst.msk [vmem:[%s143] sm:$0xff] %vm646, %v206
      %648 = vst.msk [vmem:[%s143 + $0x8] sm:$0xff] %vm646, %v209
      %649 = vst.msk [vmem:[%s143 + $0x10] sm:$0xff] %vm646, %v235
      %650 = vst.msk [vmem:[%s143 + $0x18] sm:$0xff] %vm646, %v238
      %651 = vst.msk [vmem:[%s143 + $0x20] sm:$0xff] %vm646, %v264
      %652 = vst.msk [vmem:[%s143 + $0x28] sm:$0xff] %vm646, %v267
      %653 = vst.msk [vmem:[%s143 + $0x30] sm:$0xff] %vm646, %v293
      %654 = vst.msk [vmem:[%s143 + $0x38] sm:$0xff] %vm646, %v296
      %655 = vst.msk [vmem:[%s143 + $0x40] sm:$0xff] %vm646, %v322
      %656 = vst.msk [vmem:[%s143 + $0x48] sm:$0xff] %vm646, %v325
      %657 = vst.msk [vmem:[%s143 + $0x50] sm:$0xff] %vm646, %v351
      %658 = vst.msk [vmem:[%s143 + $0x58] sm:$0xff] %vm646, %v354
      %659 = vst.msk [vmem:[%s143 + $0x60] sm:$0xff] %vm646, %v380
      %660 = vst.msk [vmem:[%s143 + $0x68] sm:$0xff] %vm646, %v383
      %661 = vst.msk [vmem:[%s143 + $0x70] sm:$0xff] %vm646, %v409
      %662 = vst.msk [vmem:[%s143 + $0x78] sm:$0xff] %vm646, %v412
      %663 = vst.msk [vmem:[%s143 + $0x80] sm:$0xff] %vm646, %v438
      %664 = vst.msk [vmem:[%s143 + $0x88] sm:$0xff] %vm646, %v441
      %665 = vst.msk [vmem:[%s143 + $0x90] sm:$0xff] %vm646, %v467
      %666 = vst.msk [vmem:[%s143 + $0x98] sm:$0xff] %vm646, %v470
      %667 = vst.msk [vmem:[%s143 + $0xa0] sm:$0xff] %vm646, %v496
      %668 = vst.msk [vmem:[%s143 + $0xa8] sm:$0xff] %vm646, %v499
      %669 = vst.msk [vmem:[%s143 + $0xb0] sm:$0xff] %vm646, %v525
      %670 = vst.msk [vmem:[%s143 + $0xb8] sm:$0xff] %vm646, %v528
      %671 = vst.msk [vmem:[%s143 + $0xc0] sm:$0xff] %vm646, %v554
      %672 = vst.msk [vmem:[%s143 + $0xc8] sm:$0xff] %vm646, %v557
      %673 = vst.msk [vmem:[%s143 + $0xd0] sm:$0xff] %vm646, %v583
      %674 = vst.msk [vmem:[%s143 + $0xd8] sm:$0xff] %vm646, %v586
      %675 = vst.msk [vmem:[%s143 + $0xe0] sm:$0xff] %vm646, %v612
      %676 = vst.msk [vmem:[%s143 + $0xe8] sm:$0xff] %vm646, %v615
      %677 = vst.msk [vmem:[%s143 + $0xf0] sm:$0xff] %vm646, %v641
      %678 = vst.msk [vmem:[%s143 + $0xf8] sm:$0xff] %vm646, %v644
      %p679 = scmp.lt.s32.totalorder %s13, 1
      %s680 = scalar_select %p679, %s13, 1
      %s681 = smul.addr %s680, 32
      %s682 = smul.addr %s681, 8
      %s683 = scalar_lea.vmem %s2, %s682
      // Predicated region
      $region29: #{tpu_custom_call.1} parent=27 // pred_check
        %p684 = pneg %p78
      $region30: #{tpu_custom_call.1} parent=27 // pred_check_branch
        %686 = sbr.rel (%p684) target = $region32
      $region31: #{tpu_custom_call.1} parent=27 // pred_region
        _
      $region32: #{tpu_custom_call.1} parent=27 // pred_fallthru
        _
    $region28: #{tpu_custom_call.1} parent=5 // pred_fallthru
      _
    %p687 = scmp.le.s32.totalorder 2, %s8
    // Predicated region
    $region33: #{tpu_custom_call.1} parent=5 // pred_check
      %p688 = pneg %p687
    $region34: #{tpu_custom_call.1} parent=5 // pred_check_branch
      %690 = sbr.rel (%p688) target = $region36
    $region35: #{tpu_custom_call.1} parent=5 // pred_region
      %s691 = ssub.s32 %s8, 2
      // Predicated region
      $region37: #{tpu_custom_call.1} parent=35 // pred_check
        %p692 = pneg %p84
      $region38: #{tpu_custom_call.1} parent=35 // pred_check_branch
        %694 = sbr.rel (%p692) target = $region40
      $region39: #{tpu_custom_call.1} parent=35 // pred_region
        %p695 = scmp.lt.s32.totalorder %s14, 1
        %s696 = scalar_select %p695, %s14, 1
        %s697 = smul.addr %s696, 32
        %s698 = smul.addr %s697, 8
        %s699 = scalar_lea.vmem %s2, %s698
      $region40: #{tpu_custom_call.1} parent=35 // pred_fallthru
        _
    $region36: #{tpu_custom_call.1} parent=5 // pred_fallthru
      _
  $region6: #{tpu_custom_call.1} parent=0 // loop_footer
    %s12 = sadd.s32 1, %s8
  $region7: #{tpu_custom_call.1} parent=0 // loop_footer_branch
    %7 = sbr.rel target = $region3
  $region8: #{tpu_custom_call.1} parent=0 // loop_exit
    _

</llo_original>
